<compile_context>
chip_gen: v7x
topology: tpu7x:2x2x1
jax: 0.10.0
libtpu: 0.0.40
codegen_flags: <defaults>
</compile_context>

<pallas_src>
import numpy as np
import jax
import jax.numpy as jnp
from jax.experimental import pallas as pl
from jax.experimental.pallas import tpu as pltpu


def _bias_kernel(bias_ref, x_ref, o_ref):
    # bias_ref: SMEM (N*3,) f32; x_ref/o_ref: VMEM (1, TH, W) tile.
    b = bias_ref[pl.program_id(0)].astype(o_ref.dtype)
    o_ref[...] = x_ref[...] + b


def _scale_bias_kernel(scale_ref, bias_ref, x_ref, o_ref):
    r = pl.program_id(0)
    s = scale_ref[r].astype(o_ref.dtype)
    b = bias_ref[r].astype(o_ref.dtype)
    o_ref[...] = x_ref[...] * s + b


def _extract_scale(weight):
    """(3,3) or (3,3,1,1) diagonal conv weight -> ((3,) f32 scale, is_unit_scale)."""
    w = jnp.asarray(weight)
    if w.ndim == 4:
        assert w.shape[2] == 1 and w.shape[3] == 1, "expected a 1x1 conv weight"
        w = w.reshape(w.shape[0], w.shape[1])
    assert w.shape == (3, 3)
    scale = jnp.diagonal(w).astype(jnp.float32)
    unit = False
    try:
        wn = np.asarray(w)          # fails if `weight` is a tracer
    except Exception:
        wn = None
    if wn is not None:
        if not np.allclose(wn, np.diag(np.diagonal(wn))):
            # TODO(synk): a general (non-diagonal) 1x1 conv would need a 3-term
            # accumulation; the reference module freezes the weight to eye(3).
            raise ValueError("MeanShift Pallas kernel requires a diagonal 1x1 conv weight")
        unit = bool(np.allclose(np.diagonal(wn), 1.0))
    return scale, unit


def mean_shift(x_nchw, weight, bias, *, max_block_bytes=1 << 20):
    """MeanShift forward: nn.Conv2d(3,3,1) with weight=eye(3), bias=sign*mean_rgb."""
    N, C, H, W = x_nchw.shape
    assert C == 3
    if not jnp.issubdtype(x_nchw.dtype, jnp.floating):
        raise TypeError("MeanShift Pallas kernel expects a floating-point input dtype")
    R = N * C

    scale3, unit_scale = _extract_scale(weight)
    bias3 = jnp.asarray(bias, jnp.float32).reshape(C)
    scale_rows = jnp.tile(scale3, N)            # (N*3,) f32, lives in SMEM
    bias_rows = jnp.tile(bias3, N)              # (N*3,) f32, lives in SMEM

    x3 = x_nchw.reshape(R, H, W)                # free, contiguous reshape

    # --- row-tile size: sublane-dense, budgeted against the *lane-padded* block ---
    itemsize = x3.dtype.itemsize
    sub = max(8, 32 // itemsize)                # native sublane packing: 8 (f32) / 16 (bf16)
    w_pad = pl.cdiv(W, 128) * 128               # VMEM lanes pad to multiples of 128
    th_budget = max(sub, (max_block_bytes // (w_pad * itemsize)) // sub * sub)
    th = H if H <= th_budget else th_budget     # full H, or a multiple of `sub`

    # Guarantee >= 4 grid steps when the image allows (v7x: 2 TCs + DMA/compute overlap).
    n_h = pl.cdiv(H, th)
    if R * n_h < 4:
        want_h_tiles = pl.cdiv(4, R)
        th_small = (H // want_h_tiles) // sub * sub
        if th_small >= sub:
            th = min(th, th_small)
            n_h = pl.cdiv(H, th)

    block_bytes = th * w_pad * itemsize
    # 2 arrays (in + out), each double-buffered, + headroom for compiler scratch.
    vmem_limit = int(min(64 << 20, 4 * block_bytes + (4 << 20)))

    smem_spec = pl.BlockSpec(memory_space=pltpu.MemorySpace.SMEM)
    tile_spec = pl.BlockSpec((1, th, W), lambda r, h: (r, h, 0))

    if unit_scale:
        kernel = _bias_kernel
        scalar_args = (bias_rows,)
        scalar_specs = [smem_spec]
    else:
        kernel = _scale_bias_kernel
        scalar_args = (scale_rows, bias_rows)
        scalar_specs = [smem_spec, smem_spec]

    out = pl.pallas_call(
        kernel,
        out_shape=jax.ShapeDtypeStruct((R, H, W), x3.dtype),
        grid_spec=pltpu.PrefetchScalarGridSpec(
            num_scalar_prefetch=0,
            grid=(R, n_h),
            in_specs=[*scalar_specs, tile_spec],
            out_specs=tile_spec,
        ),
        compiler_params=pltpu.CompilerParams(
            dimension_semantics=("parallel", "parallel"),
            vmem_limit_bytes=vmem_limit,
        ),
    )(*scalar_args, x3)

    return out.reshape(N, C, H, W)


def make_meanshift_params(mean_rgb, sub):
    """Mirror MeanShift.__init__: weight = eye(3).view(3,3,1,1), bias = sign * mean_rgb.

    The reference module applies no rgb_std division, so none is applied here.
    """
    sign = -1.0 if sub else 1.0
    weight = jnp.eye(3, dtype=jnp.float32).reshape(3, 3, 1, 1)
    bias = jnp.array([m * sign for m in mean_rgb], dtype=jnp.float32)
    return weight, bias


if __name__ == "__main__":
    key = jax.random.PRNGKey(0)

    # Main check: matches the reference module (weight = eye(3), bias = -mean_rgb).
    N, C, H, W = 2, 3, 16, 16
    x = jax.random.normal(key, (N, C, H, W), dtype=jnp.float32)
    mean_rgb = (0.4488, 0.4371, 0.4040)
    weight, bias = make_meanshift_params(mean_rgb, sub=True)
    y = jax.block_until_ready(mean_shift(x, weight, bias))
    y_ref = x + bias.reshape(1, C, 1, 1)            # eye(3) 1x1 conv == bias add
    assert y.shape == (N, C, H, W)
    assert jnp.allclose(y, y_ref, atol=1e-6, rtol=1e-6)

    # Extra coverage: ragged H tile (no wrapper pad/slice) + non-unit diagonal scale.
    x2 = jax.random.normal(jax.random.PRNGKey(0), (1, 3, 100, 160), dtype=jnp.float32)
    w2 = jnp.diag(jnp.array([0.5, 2.0, 1.5], dtype=jnp.float32))
    b2 = jnp.array([0.1, -0.2, 0.3], dtype=jnp.float32)
    y2 = jax.block_until_ready(mean_shift(x2, w2, b2))
    y2_ref = x2 * jnp.diagonal(w2).reshape(1, 3, 1, 1) + b2.reshape(1, 3, 1, 1)
    assert jnp.allclose(y2, y2_ref, atol=1e-5, rtol=1e-5)

    print("KERNEL_OK")
</pallas_src>

<mosaic_0001>
module attributes {stable_mosaic.version = 11 : i64} {
  func.func @_bias_kernel(%arg0: i32, %arg1: i32, %arg2: memref<6xf32, #tpu.memory_space<smem>>, %arg3: memref<1x16x16xf32, #tpu.memory_space<vmem>>, %arg4: memref<1x16x16xf32, #tpu.memory_space<vmem>>) attributes {dimension_semantics = [#tpu.dimension_semantics<parallel>, #tpu.dimension_semantics<parallel>], iteration_bounds = array<i64: 6, 1>, scalar_prefetch = 0 : i64, scratch_operands = 0 : i64, tpu.core_type = #tpu.core_type<tc>, window_params = [{transform_indices = @transform_0, window_bounds = array<i64: 6>}, {transform_indices = @transform_1, window_bounds = array<i64: 1, 16, 16>}, {transform_indices = @transform_2, window_bounds = array<i64: 1, 16, 16>}]} {
    %0 = arith.index_cast %arg0 : i32 to index
    %1 = memref.load %arg2[%0] : memref<6xf32, #tpu.memory_space<smem>>
    %c0 = arith.constant 0 : index
    %c0_0 = arith.constant 0 : index
    %c0_1 = arith.constant 0 : index
    %2 = vector.load %arg3[%c0, %c0_0, %c0_1] : memref<1x16x16xf32, #tpu.memory_space<vmem>>, vector<1x16x16xf32>
    %3 = vector.broadcast %1 : f32 to vector<1x16x16xf32>
    %4 = arith.addf %2, %3 : vector<1x16x16xf32>
    %c0_2 = arith.constant 0 : index
    %c0_3 = arith.constant 0 : index
    %c0_4 = arith.constant 0 : index
    %5 = vector.load %arg4[%c0_2, %c0_3, %c0_4] : memref<1x16x16xf32, #tpu.memory_space<vmem>>, vector<1x16x16xf32>
    tpu.vector_store %arg4[%c0_2, %c0_3, %c0_4], %4 {strides = array<i32>} : memref<1x16x16xf32, #tpu.memory_space<vmem>>, vector<1x16x16xf32>,
    return
  }
  func.func @transform_0(%arg0: i32, %arg1: i32) -> i32 {
    %c0_i32 = arith.constant 0 : i32
    %c0_i32_0 = arith.constant 0 : i32
    return %c0_i32 : i32
  }
  func.func @transform_1(%arg0: i32, %arg1: i32) -> (i32, i32, i32) {
    %c0_i32 = arith.constant 0 : i32
    %c0_i32_0 = arith.constant 0 : i32
    return %arg0, %arg1, %c0_i32 : i32, i32, i32
  }
  func.func @transform_2(%arg0: i32, %arg1: i32) -> (i32, i32, i32) {
    %c0_i32 = arith.constant 0 : i32
    %c0_i32_0 = arith.constant 0 : i32
    return %arg0, %arg1, %c0_i32 : i32, i32, i32
  }
}

</mosaic_0001>

<llo_original>
// kernel: tpu_custom_call.1
$region0: #{tpu_custom_call.1}
  #allocation0 [shape = 'u32[]', space=smem, size = 0x4, offset = 0x4, fixed_abs, tag = 'smem constant byte address 0x4 - core index']
  #allocation1 [shape = 'u32[144,128]{1,0:T(1,128)}', space=vmem, size = 0x12000, scoped, tag = 'internal scratch']
  %s0 = inlined_call_operand.hbm [shape: f32[6], index: 0, kind: input, shape index: {}]
  %s1 = inlined_call_operand.hbm [shape: f32[6,16,16], index: 1, kind: input, shape index: {}]
  %s2 = inlined_call_operand.hbm [shape: f32[6,16,16], index: 2, kind: output, shape index: {}]
  %s3 = sld [smem:[#allocation0]]
  $region49: #{tpu_custom_call.1} parent=0
    _
  %s5 = ssub.s32 1, %s3
  %s6 = scalar_select 0, %s5, %s3
  $region1: #{tpu_custom_call.1} parent=0
    #allocation2 [shape = 'u8[512]{0}', space=smem, size = 0x200, scoped, tag = 'input window, operand 0, single buffered']
    #allocation3 [shape = 's32[2]{0}', space=sflag, size = 0x8, scoped, tag = 'scoped memory for tpu_custom_call.1']
    #allocation4 [shape = 's32[2]{0}', space=sflag, size = 0x8, scoped, tag = 'scoped memory for tpu_custom_call.1']
    #allocation5 [shape = 's32[2]{0}', space=sflag, size = 0x8, scoped, tag = 'scoped memory for tpu_custom_call.1']
    #allocation6 [shape = 'u8[16384]{0}', space=vmem, size = 0x4000, scoped, tag = 'input window, operand 1']
    #allocation7 [shape = 'u8[16384]{0}', space=vmem, size = 0x4000, scoped, tag = 'output window, operand 0']
    %7 = vsyncpa [#allocation5], 0
    %8 = vsyncpa [#allocation3], 0
    %s9 = scalar_lea.sflag [#allocation3], 1
    %10 = vsyncpa %s9, 0
    %11 = vsyncpa [#allocation4], 0
    %s12 = scalar_lea.sflag [#allocation4], 1
    %13 = vsyncpa %s12, 0
    loop: start=0, step=1, limit=8
    $region2: #{tpu_custom_call.1} parent=1 // loop_pre_header
      _
    $region3: #{tpu_custom_call.1} parent=1 // loop_header
      %s15 = sphi 0, %s19
      %p16 = scmp.ge.s32.totalorder %s15, 8
      %s22 = sphi 0, %s34
      %s23 = sphi 0, %s30
      %s24 = sphi 0, %s22
      %s25 = sphi 0, %s23
      %s26 = sphi 0, %s24
      %s27 = sphi 0, %s25
      %s35 = sphi 0, %s35
      %s37 = sphi 0, %s35
      %s38 = sphi 0, %s37
      %s52 = sphi 0, %s38
      %s60 = sphi 0, %s62
      %s63 = sphi 0, %s60
      %s64 = sphi 0, %s63
      %s80 = sphi 0, %s64
      %s88 = sphi 0, %s90
      %s91 = sphi 0, %s88
      %s92 = sphi 0, %s91
      %s108 = sphi 0, %s92
    $region4: #{tpu_custom_call.1} parent=1 // loop_header_branch
      %18 = sbr.rel (%p16) target = $region8
    $region5: #{tpu_custom_call.1} parent=1 // loop_body
      %s20 = ssub.s32 %s15, 1
      %s21 = ssub.s32 %s15, 2
      %s28 = sadd.s32 1, %s23
      %p29 = scmp.ge.s32.totalorder %s28, 1
      %s30 = scalar_select %p29, 0, %s28
      %s31 = sadd.s32 1, %s22
      %s32 = scalar_select %p29, %s31, %s22
      %p33 = scmp.ge.s32.totalorder %s32, 6
      %s34 = scalar_select %p33, 0, %s32
      %s36 = sadd.s32 %s35, 1
      %p39 = scmp.eq.s32.totalorder %s15, 5
      %p40 = scmp.ne.s32.totalorder %s35, %s37
      %p41 = scmp.eq.s32.totalorder %s15, 0
      %p42 = por %p40, %p41
      %p43 = scmp.ne.s32.totalorder %s35, %s37
      %p44 = scmp.eq.s32.totalorder %s20, 5
      %p45 = por %p43, %p44
      %p46 = scmp.ne.s32.totalorder %s37, %s38
      %p47 = scmp.eq.s32.totalorder %s20, 0
      %p48 = por %p46, %p47
      %p49 = scmp.ne.s32.totalorder %s37, %s38
      %p50 = scmp.eq.s32.totalorder %s21, 5
      %p51 = por %p49, %p50
      %p53 = scmp.ne.s32.totalorder %s38, %s52
      %p54 = scmp.eq.s32.totalorder %s21, 0
      %p55 = por %p53, %p54
      %s56 = ssub.s32 %s22, %s34
      %s57 = ssub.s32 %s23, %s30
      %s58 = sor.u32 %s56, %s57
      %p59 = scmp.eq.s32.totalorder %s58, 0
      %s61 = sadd.s32 %s60, 1
      %s62 = scalar_select %p59, %s60, %s61
      %p65 = pneg %p59
      %p66 = scmp.eq.s32.totalorder %s15, 5
      %p67 = por %p65, %p66
      %p68 = scmp.ne.s32.totalorder %s60, %s63
      %p69 = scmp.eq.s32.totalorder %s15, 0
      %p70 = por %p68, %p69
      %p71 = scmp.ne.s32.totalorder %s60, %s63
      %p72 = scmp.eq.s32.totalorder %s20, 5
      %p73 = por %p71, %p72
      %p74 = scmp.ne.s32.totalorder %s63, %s64
      %p75 = scmp.eq.s32.totalorder %s20, 0
      %p76 = por %p74, %p75
      %p77 = scmp.ne.s32.totalorder %s63, %s64
      %p78 = scmp.eq.s32.totalorder %s21, 5
      %p79 = por %p77, %p78
      %p81 = scmp.ne.s32.totalorder %s64, %s80
      %p82 = scmp.eq.s32.totalorder %s21, 0
      %p83 = por %p81, %p82
      %s84 = ssub.s32 %s22, %s34
      %s85 = ssub.s32 %s23, %s30
      %s86 = sor.u32 %s84, %s85
      %p87 = scmp.eq.s32.totalorder %s86, 0
      %s89 = sadd.s32 %s88, 1
      %s90 = scalar_select %p87, %s88, %s89
      %p93 = pneg %p87
      %p94 = scmp.eq.s32.totalorder %s15, 5
      %p95 = por %p93, %p94
      %p96 = scmp.ne.s32.totalorder %s88, %s91
      %p97 = scmp.eq.s32.totalorder %s15, 0
      %p98 = por %p96, %p97
      %p99 = scmp.ne.s32.totalorder %s88, %s91
      %p100 = scmp.eq.s32.totalorder %s20, 5
      %p101 = por %p99, %p100
      %p102 = scmp.ne.s32.totalorder %s91, %s92
      %p103 = scmp.eq.s32.totalorder %s20, 0
      %p104 = por %p102, %p103
      %p105 = scmp.ne.s32.totalorder %s91, %s92
      %p106 = scmp.eq.s32.totalorder %s21, 5
      %p107 = por %p105, %p106
      %p109 = scmp.ne.s32.totalorder %s92, %s108
      %p110 = scmp.eq.s32.totalorder %s21, 0
      %p111 = por %p109, %p110
      %p112 = scmp.le.s32.totalorder 1, %s15
      %p113 = scmp.lt.s32.totalorder %s15, 7
      %p114 = pnand %p112, %p113
      %p115 = pneg %p114
      // Predicated region
      $region9: #{tpu_custom_call.1} parent=5 // pred_check
        _
      $region10: #{tpu_custom_call.1} parent=5 // pred_check_branch
        %117 = sbr.rel (%p114) target = $region12
      $region11: #{tpu_custom_call.1} parent=5 // pred_region
        %s118 = ssub.s32 %s15, 1
        // Predicated region
        $region13: #{tpu_custom_call.1} parent=11 // pred_check
          %p119 = pneg %p48
        $region14: #{tpu_custom_call.1} parent=11 // pred_check_branch
          %121 = sbr.rel (%p119) target = $region16
        $region15: #{tpu_custom_call.1} parent=11 // pred_region
          %s123 = ssub.s32 16, 16
          %124 = vsyncadd [#allocation5], %s123
          %127 = dma.hbm_to_smem %s0, 16, [#allocation2], [#allocation5]
        $region16: #{tpu_custom_call.1} parent=11 // pred_fallthru
          _
      $region12: #{tpu_custom_call.1} parent=5 // pred_fallthru
        _
      %p128 = scmp.lt.s32.totalorder %s15, 6
      // Predicated region
      $region17: #{tpu_custom_call.1} parent=5 // pred_check
        %p129 = pneg %p128
      $region18: #{tpu_custom_call.1} parent=5 // pred_check_branch
        %131 = sbr.rel (%p129) target = $region20
      $region19: #{tpu_custom_call.1} parent=5 // pred_region
        // Predicated region
        $region21: #{tpu_custom_call.1} parent=19 // pred_check
          %p132 = pneg %p70
        $region22: #{tpu_custom_call.1} parent=19 // pred_check_branch
          %134 = sbr.rel (%p132) target = $region24
        $region23: #{tpu_custom_call.1} parent=19 // pred_region
          %s135 = sand.u32 %s60, 1
          %s136 = scalar_lea.sflag [#allocation3], %s135
          %s137 = sand.u32 %s60, 1
          %s138 = smul.addr %s137, 16
          %s139 = scalar_lea.vmem [#allocation6], %s138
          %s140 = smul.u32 2, %s23
          %s142 = ssub.s32 256, 256
          %143 = vsyncadd %s136, %s142
          %s144 = smul.addr %s22, 2
          %s145 = sadd.s32 %s140, %s144
          %s146 = smul.addr %s145, 128
          %s147 = scalar_lea.hbm %s1, %s146
          %s148 = sshll.u32 %s139, 4
          %s149 = int_to_ptr.vmem [resolvable:$true] %s148
          %154 = dma.hbm_to_vmem [thread:$0]  %s147, 256, %s149, %s136, 128, 128, 8
        $region24: #{tpu_custom_call.1} parent=19 // pred_fallthru
          _
      $region20: #{tpu_custom_call.1} parent=5 // pred_fallthru
        _
      %p155 = scmp.le.s32.totalorder 1, %s15
      %p156 = scmp.lt.s32.totalorder %s15, 7
      %p157 = pnand %p155, %p156
      %p158 = pneg %p157
      // Predicated region
      $region25: #{tpu_custom_call.1} parent=5 // pred_check
        _
      $region26: #{tpu_custom_call.1} parent=5 // pred_check_branch
        %160 = sbr.rel (%p157) target = $region28
      $region27: #{tpu_custom_call.1} parent=5 // pred_region
        %s161 = ssub.s32 %s15, 1
        // Predicated region
        $region29: #{tpu_custom_call.1} parent=27 // pred_check
          %p162 = pneg %p48
        $region30: #{tpu_custom_call.1} parent=27 // pred_check_branch
          %164 = sbr.rel (%p162) target = $region32
        $region31: #{tpu_custom_call.1} parent=27 // pred_region
          %165 = dma.done [#allocation5], 16
        $region32: #{tpu_custom_call.1} parent=27 // pred_fallthru
          _
        %s166 = sand.u32 %s63, 1
        %s167 = scalar_lea.sflag [#allocation3], %s166
        %s168 = sand.u32 %s63, 1
        %s169 = smul.addr %s168, 16
        %s170 = scalar_lea.vmem [#allocation6], %s169
        // Predicated region
        $region33: #{tpu_custom_call.1} parent=27 // pred_check
          %p171 = pneg %p76
        $region34: #{tpu_custom_call.1} parent=27 // pred_check_branch
          %173 = sbr.rel (%p171) target = $region36
        $region35: #{tpu_custom_call.1} parent=27 // pred_region
          %174 = dma.done %s167, 256
        $region36: #{tpu_custom_call.1} parent=27 // pred_fallthru
          _
        %175 = sfence
        %p176 = pneg %p48
        %p177 = pneg %p45
        %s178 = sand.u32 %s63, 1
        %s179 = scalar_lea.sflag [#allocation3], %s178
        %s180 = sand.u32 %s63, 1
        %s181 = smul.addr %s180, 16
        %s182 = scalar_lea.vmem [#allocation6], %s181
        %p183 = pneg %p76
        %p184 = pneg %p73
        %p185 = pneg %p104
        %p186 = pneg %p101
        %s187 = sand.u32 %s91, 1
        %s188 = scalar_lea.sflag [#allocation4], %s187
        %s189 = sand.u32 %s91, 1
        %s190 = smul.addr %s189, 16
        %s191 = scalar_lea.vmem [#allocation7], %s190
        %s192 = smul.u32 2, %s25
        %s193 = smul.u32 2, %s25
        %s194 = sld [smem:[#allocation2 + %s24]]
        %v195 = vld [vmem:[%s170] sm:$0xff]
        %v196 = vld [vmem:[%s170 + $0x8] sm:$0xff]
        %v197 = vstv %s194
        %v198 = vadd.f32 %v195, %v197
        %v199 = vadd.f32 %v196, %v197
        %vm200 = vcmask 130048
        %201 = vst.msk [vmem:[%s191] sm:$0xff] %vm200, %v198
        %202 = vst.msk [vmem:[%s191 + $0x8] sm:$0xff] %vm200, %v199
        %s203 = sand.u32 %s91, 1
        %s204 = scalar_lea.sflag [#allocation4], %s203
        %s205 = sand.u32 %s91, 1
        %s206 = smul.addr %s205, 16
        %s207 = scalar_lea.vmem [#allocation7], %s206
        // Predicated region
        $region37: #{tpu_custom_call.1} parent=27 // pred_check
          %p208 = pneg %p101
        $region38: #{tpu_custom_call.1} parent=27 // pred_check_branch
          %210 = sbr.rel (%p208) target = $region40
        $region39: #{tpu_custom_call.1} parent=27 // pred_region
          %s211 = smul.u32 2, %s25
          %s213 = ssub.s32 256, 256
          %214 = vsyncadd %s204, %s213
          %s215 = smul.addr %s24, 2
          %s216 = sadd.s32 %s211, %s215
          %s217 = smul.addr %s216, 128
          %s218 = scalar_lea.hbm %s2, %s217
          %s219 = sshll.u32 %s207, 4
          %s220 = int_to_ptr.vmem [resolvable:$true] %s219
          %225 = dma.vmem_to_hbm [thread:$0]  %s220, 256, %s218, %s204, 128, 128, 8
        $region40: #{tpu_custom_call.1} parent=27 // pred_fallthru
          _
      $region28: #{tpu_custom_call.1} parent=5 // pred_fallthru
        _
      %p226 = scmp.le.s32.totalorder 2, %s15
      // Predicated region
      $region41: #{tpu_custom_call.1} parent=5 // pred_check
        %p227 = pneg %p226
      $region42: #{tpu_custom_call.1} parent=5 // pred_check_branch
        %229 = sbr.rel (%p227) target = $region44
      $region43: #{tpu_custom_call.1} parent=5 // pred_region
        %s230 = ssub.s32 %s15, 2
        // Predicated region
        $region45: #{tpu_custom_call.1} parent=43 // pred_check
          %p231 = pneg %p107
        $region46: #{tpu_custom_call.1} parent=43 // pred_check_branch
          %233 = sbr.rel (%p231) target = $region48
        $region47: #{tpu_custom_call.1} parent=43 // pred_region
          %s234 = sand.u32 %s92, 1
          %s235 = scalar_lea.sflag [#allocation4], %s234
          %s236 = sand.u32 %s92, 1
          %s237 = smul.addr %s236, 16
          %s238 = scalar_lea.vmem [#allocation7], %s237
          %239 = dma.done %s235, 256
        $region48: #{tpu_custom_call.1} parent=43 // pred_fallthru
          _
      $region44: #{tpu_custom_call.1} parent=5 // pred_fallthru
        _
    $region6: #{tpu_custom_call.1} parent=1 // loop_footer
      %s19 = sadd.s32 1, %s15
    $region7: #{tpu_custom_call.1} parent=1 // loop_footer_branch
      %14 = sbr.rel target = $region3
    $region8: #{tpu_custom_call.1} parent=1 // loop_exit
      _
    %240 = vsyncpa [#allocation3], 1
    %s241 = scalar_lea.sflag [#allocation3], 1
    %242 = vsyncpa %s241, 1
    %243 = vsyncpa [#allocation4], 1
    %s244 = scalar_lea.sflag [#allocation4], 1
    %245 = vsyncpa %s244, 1
    %246 = vsyncpa [#allocation5], 1
    %s247 = scalar_lea.sflag [#allocation5], 1
    %248 = vsyncpa %s247, 1

</llo_original>
